<compile_context>
chip_gen: v7x
topology: tpu7x:2x2x1
jax: 0.10.0
libtpu: 0.0.40
codegen_flags: <defaults>
</compile_context>

<pallas_src>
import functools

import jax
import jax.numpy as jnp
from jax import lax
from jax.experimental import pallas as pl
from jax.experimental.pallas import tpu as pltpu


def _ce_kernel(*refs, has_weight, ignore_index, label_smoothing):
    """Grid = (num_splits [parallel], steps [arbitrary/reduction]).

    Accumulates per-row weighted losses and per-row target weights into VMEM
    scratch; reduces to per-split scalars only on the last reduction step.
    """
    if has_weight:
        pred_ref, tgt_ref, w_ref, loss_out_ref, wsum_out_ref, acc_loss, acc_w = refs
    else:
        pred_ref, tgt_ref, loss_out_ref, wsum_out_ref, acc_loss, acc_w = refs
        w_ref = None

    i = pl.program_id(1)
    n_steps = pl.num_programs(1)

    @pl.when(i == 0)
    def _():
        acc_loss[...] = jnp.zeros_like(acc_loss)
        acc_w[...] = jnp.zeros_like(acc_w)

    x = pred_ref[...].astype(jnp.float32)      # (tn, C) logits
    t = tgt_ref[...]                           # (tn, 1) int32 targets
    tn, C = x.shape

    valid = t != ignore_index                  # (tn, 1) bool (pad rows excluded too)
    valid_f = valid.astype(jnp.float32)

    # Numerically-stable log-sum-exp over the class (lane) axis.
    m = jnp.max(x, axis=-1, keepdims=True)
    lse = m + jnp.log(jnp.sum(jnp.exp(x - m), axis=-1, keepdims=True))  # (tn, 1)

    # Gather the logit at the target index via one-hot masking.
    cls = lax.broadcasted_iota(jnp.int32, (tn, C), 1)
    onehot = cls == t                                                   # (tn, C)
    logit_t = jnp.sum(jnp.where(onehot, x, 0.0), axis=-1, keepdims=True)
    nll = lse - logit_t                                                 # (tn, 1)

    eps = float(label_smoothing)
    if has_weight:
        w = w_ref[...].astype(jnp.float32)     # (1, C)
        w_t = jnp.sum(jnp.where(onehot, w, 0.0), axis=-1, keepdims=True)
        if eps > 0.0:
            # (eps/C) * sum_c w_c * (-log p_c)  — matches torch's weighted
            # label-smoothing term (mean denominator is sum of w_{y_i}).
            smooth = jnp.sum(w * (lse - x), axis=-1, keepdims=True) / C
            per = (1.0 - eps) * w_t * nll + eps * smooth
        else:
            per = w_t * nll
        w_t = jnp.where(valid, w_t, 0.0)
    else:
        # weight=None: per-sample weight is 1 -> accumulate valid count.
        w_t = valid_f
        if eps > 0.0:
            smooth = jnp.sum(lse - x, axis=-1, keepdims=True) / C
            per = (1.0 - eps) * nll + eps * smooth
        else:
            per = nll

    per = jnp.where(valid, per, 0.0)

    acc_loss[...] = acc_loss[...] + per
    acc_w[...] = acc_w[...] + w_t

    # Final scalar reduction + lane-dense store, once per split.
    @pl.when(i == n_steps - 1)
    def _():
        loss_out_ref[...] = jnp.zeros_like(loss_out_ref) + jnp.sum(acc_loss[...])
        wsum_out_ref[...] = jnp.zeros_like(wsum_out_ref) + jnp.sum(acc_w[...])


def cross_entropy_loss(pred, target, weight=None, *, reduction="mean",
                       label_smoothing=0.0, loss_weight=1.0, ignore_index=-1,
                       tile_n=None, num_splits=2):
    """Pallas implementation of CrossEntropyLoss.forward(pred, target).

    pred:   (N, C) float logits (class dim last -> lane axis).
    target: (N,)   int class indices; ignore_index entries excluded.
    Note: if every target is ignore_index, the mean reduction is 0/0 (NaN/inf),
    matching PyTorch.
    """
    N, C = pred.shape
    has_weight = weight is not None

    # --- choose tile_n: as large as possible while a double-buffered logits
    # tile stays well inside the scoped VMEM limit; capped by what N needs. ---
    if tile_n is None:
        per_row_bytes = C * 4
        budget = 6 * 1024 * 1024                      # per logits buffer
        tile_n = max(8, min(2048, budget // per_row_bytes))
        need = (N + num_splits - 1) // num_splits     # rows per split
        tile_n = min(tile_n, ((need + 7) // 8) * 8)
    tile_n = max(8, (tile_n // 8) * 8)
    # TODO(synk): vocab-scale C would need a class-axis grid dim with an
    # online logsumexp; not needed for semantic-segmentation class counts.

    # --- pad N so every split has the same whole number of tiles; pad rows get
    # ignore_index targets so they contribute nothing. ---
    chunk = num_splits * tile_n
    n_pad = (-N) % chunk
    N_pad = N + n_pad
    steps = N_pad // chunk                            # reduction steps per split

    pred_p = jnp.pad(pred, ((0, n_pad), (0, 0))) if n_pad else pred
    tgt = target.astype(jnp.int32)
    if n_pad:
        tgt = jnp.pad(tgt, (0, n_pad), constant_values=ignore_index)
    tgt2d = tgt.reshape(N_pad, 1)

    kernel = functools.partial(_ce_kernel, has_weight=has_weight,
                               ignore_index=int(ignore_index),
                               label_smoothing=float(label_smoothing))

    row_map = lambda p, i: (p * steps + i, 0)
    in_specs = [
        pl.BlockSpec((tile_n, C), row_map),           # logits tile
        pl.BlockSpec((tile_n, 1), row_map),           # target tile
    ]
    args = [pred_p, tgt2d]
    if has_weight:
        w2d = jnp.asarray(weight, jnp.float32).reshape(1, C)
        in_specs.append(pl.BlockSpec((1, C), lambda p, i: (0, 0)))
        args.append(w2d)

    # Per-split partial sums, broadcast into lane-dense (8, 128) blocks.
    out_shape = (jax.ShapeDtypeStruct((num_splits * 8, 128), jnp.float32),
                 jax.ShapeDtypeStruct((num_splits * 8, 128), jnp.float32))
    out_specs = (pl.BlockSpec((8, 128), lambda p, i: (p, 0)),
                 pl.BlockSpec((8, 128), lambda p, i: (p, 0)))

    loss_parts, w_parts = pl.pallas_call(
        kernel,
        out_shape=out_shape,
        grid_spec=pltpu.PrefetchScalarGridSpec(
            num_scalar_prefetch=0,
            grid=(num_splits, steps),
            in_specs=in_specs,
            out_specs=out_specs,
            scratch_shapes=[pltpu.VMEM((tile_n, 1), jnp.float32),   # loss acc
                            pltpu.VMEM((tile_n, 1), jnp.float32)],  # weight acc
        ),
        compiler_params=pltpu.CompilerParams(
            dimension_semantics=("parallel", "arbitrary"),
            vmem_limit_bytes=32 * 1024 * 1024),
    )(*args)

    # Each (8,128) block holds one broadcast partial sum -> pick one lane/row.
    loss_sum = jnp.sum(loss_parts[0::8, 0])
    w_sum = jnp.sum(w_parts[0::8, 0])

    if reduction == "mean":
        out = loss_sum / w_sum
    elif reduction == "sum":
        out = loss_sum
    else:
        # TODO(synk): reduction='none' needs a per-sample output buffer.
        raise NotImplementedError(f"reduction={reduction!r} not supported")
    return out * loss_weight


def _reference(pred, target, weight, ignore_index, label_smoothing=0.0):
    """Pure-JAX reference matching torch.nn.CrossEntropyLoss (reduction='mean')."""
    N, C = pred.shape
    logp = jax.nn.log_softmax(pred.astype(jnp.float32), axis=-1)
    valid = target != ignore_index
    safe_t = jnp.where(valid, target, 0)
    nll = -jnp.take_along_axis(logp, safe_t[:, None], axis=-1)[:, 0]
    w_t = weight[safe_t]
    smooth = -(logp * weight[None, :]).sum(-1) / C
    per = (1.0 - label_smoothing) * w_t * nll + label_smoothing * smooth
    num = jnp.sum(jnp.where(valid, per, 0.0))
    den = jnp.sum(jnp.where(valid, w_t, 0.0))
    return num / den


if __name__ == "__main__":
    key = jax.random.PRNGKey(0)
    k1, k2, k3, k4 = jax.random.split(key, 4)

    N, C = 200, 16                    # 200 points, 16 semantic classes
    pred = jax.random.normal(k1, (N, C), dtype=jnp.float32)
    target = jax.random.randint(k2, (N,), 0, C, dtype=jnp.int32)
    # Mark ~10% of points as ignored (ignore_index=-1), like unlabeled points.
    ignore_mask = jax.random.uniform(k3, (N,)) < 0.1
    target = jnp.where(ignore_mask, -1, target)

    # Module defaults: weight=None, reduction='mean', label_smoothing=0.0,
    # loss_weight=1.0, ignore_index=-1.
    loss = cross_entropy_loss(pred, target)
    loss = jax.block_until_ready(loss)
    ref = _reference(pred, target, jnp.ones((C,), jnp.float32), ignore_index=-1)
    assert abs(float(loss) - float(ref)) < 1e-4, (float(loss), float(ref))

    # Weighted path (exercises the has_weight kernel variant).
    w = jax.random.uniform(k4, (C,), minval=0.5, maxval=1.5, dtype=jnp.float32)
    loss_w = cross_entropy_loss(pred, target, weight=w)
    loss_w = jax.block_until_ready(loss_w)
    ref_w = _reference(pred, target, w, ignore_index=-1)
    assert abs(float(loss_w) - float(ref_w)) < 1e-4, (float(loss_w), float(ref_w))

    print("KERNEL_OK")
</pallas_src>

<mosaic_0001>
module attributes {stable_mosaic.version = 11 : i64} {
  func.func @_ce_kernel(%arg0: i32, %arg1: i32, %arg2: memref<104x16xf32, #tpu.memory_space<vmem>>, %arg3: memref<104x1xi32, #tpu.memory_space<vmem>>, %arg4: memref<8x128xf32, #tpu.memory_space<vmem>>, %arg5: memref<8x128xf32, #tpu.memory_space<vmem>>, %arg6: memref<104x1xf32, #tpu.memory_space<vmem>>, %arg7: memref<104x1xf32, #tpu.memory_space<vmem>>) attributes {dimension_semantics = [#tpu.dimension_semantics<parallel>, #tpu.dimension_semantics<arbitrary>], iteration_bounds = array<i64: 2, 1>, scalar_prefetch = 0 : i64, scratch_operands = 2 : i64, tpu.core_type = #tpu.core_type<tc>, window_params = [{transform_indices = @transform_0, window_bounds = array<i64: 104, 16>}, {transform_indices = @transform_1, window_bounds = array<i64: 104, 1>}, {transform_indices = @transform_2, window_bounds = array<i64: 8, 128>}, {transform_indices = @transform_3, window_bounds = array<i64: 8, 128>}]} {
    %c0_i32 = arith.constant 0 : i32
    %0 = arith.cmpi eq, %arg1, %c0_i32 : i32
    %1 = arith.extui %0 : i1 to i32
    %c0_i32_0 = arith.constant 0 : i32
    %2 = arith.cmpi ne, %1, %c0_i32_0 : i32
    scf.if %2 {
      %cst_18 = arith.constant 0.000000e+00 : f32
      %37 = vector.broadcast %cst_18 : f32 to vector<104x1xf32>
      %c0_19 = arith.constant 0 : index
      %c0_20 = arith.constant 0 : index
      %38 = vector.load %arg6[%c0_19, %c0_20] : memref<104x1xf32, #tpu.memory_space<vmem>>, vector<104x1xf32>
      tpu.vector_store %arg6[%c0_19, %c0_20], %37 {strides = array<i32>} : memref<104x1xf32, #tpu.memory_space<vmem>>, vector<104x1xf32>,
      %cst_21 = arith.constant 0.000000e+00 : f32
      %39 = vector.broadcast %cst_21 : f32 to vector<104x1xf32>
      %c0_22 = arith.constant 0 : index
      %c0_23 = arith.constant 0 : index
      %40 = vector.load %arg7[%c0_22, %c0_23] : memref<104x1xf32, #tpu.memory_space<vmem>>, vector<104x1xf32>
      tpu.vector_store %arg7[%c0_22, %c0_23], %39 {strides = array<i32>} : memref<104x1xf32, #tpu.memory_space<vmem>>, vector<104x1xf32>,
    } else {
    }
    %c0 = arith.constant 0 : index
    %c0_1 = arith.constant 0 : index
    %3 = vector.load %arg2[%c0, %c0_1] : memref<104x16xf32, #tpu.memory_space<vmem>>, vector<104x16xf32>
    %c0_2 = arith.constant 0 : index
    %c0_3 = arith.constant 0 : index
    %4 = vector.load %arg3[%c0_2, %c0_3] : memref<104x1xi32, #tpu.memory_space<vmem>>, vector<104x1xi32>
    %c-1_i32 = arith.constant -1 : i32
    %5 = vector.broadcast %c-1_i32 : i32 to vector<104x1xi32>
    %6 = arith.cmpi ne, %4, %5 : vector<104x1xi32>
    %7 = arith.extui %6 : vector<104x1xi1> to vector<104x1xi32>
    %8 = arith.sitofp %7 : vector<104x1xi32> to vector<104x1xf32>
    %cst = arith.constant dense<0xFF800000> : vector<104xf32>
    %9 = vector.multi_reduction <maximumf>, %3, %cst [1] : vector<104x16xf32> to vector<104xf32>
    %10 = vector.shape_cast %9 : vector<104xf32> to vector<104x1xf32>
    %11 = vector.broadcast %10 : vector<104x1xf32> to vector<104x16xf32>
    %12 = arith.subf %3, %11 : vector<104x16xf32>
    %13 = math.exp %12 : vector<104x16xf32>
    %cst_4 = arith.constant dense<0.000000e+00> : vector<104xf32>
    %14 = vector.multi_reduction <add>, %13, %cst_4 [1] : vector<104x16xf32> to vector<104xf32>
    %15 = vector.shape_cast %14 : vector<104xf32> to vector<104x1xf32>
    %16 = math.log %15 : vector<104x1xf32>
    %17 = arith.addf %10, %16 : vector<104x1xf32>
    %18 = tpu.iota {dimensions = array<i32: 1>} : vector<104x16xi32>
    %19 = vector.broadcast %4 : vector<104x1xi32> to vector<104x16xi32>
    %20 = arith.cmpi eq, %18, %19 : vector<104x16xi32>
    %cst_5 = arith.constant 0.000000e+00 : f32
    %21 = vector.broadcast %cst_5 : f32 to vector<104x16xf32>
    %22 = arith.select %20, %3, %21 : vector<104x16xi1>, vector<104x16xf32>
    %cst_6 = arith.constant dense<0.000000e+00> : vector<104xf32>
    %23 = vector.multi_reduction <add>, %22, %cst_6 [1] : vector<104x16xf32> to vector<104xf32>
    %24 = vector.shape_cast %23 : vector<104xf32> to vector<104x1xf32>
    %25 = arith.subf %17, %24 : vector<104x1xf32>
    %cst_7 = arith.constant 0.000000e+00 : f32
    %26 = vector.broadcast %cst_7 : f32 to vector<104x1xf32>
    %27 = arith.select %6, %25, %26 : vector<104x1xi1>, vector<104x1xf32>
    %c0_8 = arith.constant 0 : index
    %c0_9 = arith.constant 0 : index
    %28 = vector.load %arg6[%c0_8, %c0_9] : memref<104x1xf32, #tpu.memory_space<vmem>>, vector<104x1xf32>
    %29 = arith.addf %28, %27 : vector<104x1xf32>
    %c0_10 = arith.constant 0 : index
    %c0_11 = arith.constant 0 : index
    %30 = vector.load %arg6[%c0_10, %c0_11] : memref<104x1xf32, #tpu.memory_space<vmem>>, vector<104x1xf32>
    tpu.vector_store %arg6[%c0_10, %c0_11], %29 {strides = array<i32>} : memref<104x1xf32, #tpu.memory_space<vmem>>, vector<104x1xf32>,
    %c0_12 = arith.constant 0 : index
    %c0_13 = arith.constant 0 : index
    %31 = vector.load %arg7[%c0_12, %c0_13] : memref<104x1xf32, #tpu.memory_space<vmem>>, vector<104x1xf32>
    %32 = arith.addf %31, %8 : vector<104x1xf32>
    %c0_14 = arith.constant 0 : index
    %c0_15 = arith.constant 0 : index
    %33 = vector.load %arg7[%c0_14, %c0_15] : memref<104x1xf32, #tpu.memory_space<vmem>>, vector<104x1xf32>
    tpu.vector_store %arg7[%c0_14, %c0_15], %32 {strides = array<i32>} : memref<104x1xf32, #tpu.memory_space<vmem>>, vector<104x1xf32>,
    %c0_i32_16 = arith.constant 0 : i32
    %34 = arith.cmpi eq, %arg1, %c0_i32_16 : i32
    %35 = arith.extui %34 : i1 to i32
    %c0_i32_17 = arith.constant 0 : i32
    %36 = arith.cmpi ne, %35, %c0_i32_17 : i32
    scf.if %36 {
      %cst_18 = arith.constant 0.000000e+00 : f32
      %37 = vector.broadcast %cst_18 : f32 to vector<8x128xf32>
      %c0_19 = arith.constant 0 : index
      %c0_20 = arith.constant 0 : index
      %38 = vector.load %arg6[%c0_19, %c0_20] : memref<104x1xf32, #tpu.memory_space<vmem>>, vector<104x1xf32>
      %39 = vector.shape_cast %38 : vector<104x1xf32> to vector<1x104x1xf32>
      %cst_21 = arith.constant dense<0.000000e+00> : vector<1xf32>
      %40 = vector.multi_reduction <add>, %39, %cst_21 [1, 2] : vector<1x104x1xf32> to vector<1xf32>
      %41 = vector.shape_cast %40 : vector<1xf32> to vector<1x1x1xf32>
      %42 = vector.extract %41[0, 0, 0] : f32 from vector<1x1x1xf32>
      %43 = vector.broadcast %42 : f32 to vector<8x128xf32>
      %44 = arith.addf %37, %43 : vector<8x128xf32>
      %c0_22 = arith.constant 0 : index
      %c0_23 = arith.constant 0 : index
      %45 = vector.load %arg4[%c0_22, %c0_23] : memref<8x128xf32, #tpu.memory_space<vmem>>, vector<8x128xf32>
      tpu.vector_store %arg4[%c0_22, %c0_23], %44 {strides = array<i32>} : memref<8x128xf32, #tpu.memory_space<vmem>>, vector<8x128xf32>,
      %cst_24 = arith.constant 0.000000e+00 : f32
      %46 = vector.broadcast %cst_24 : f32 to vector<8x128xf32>
      %c0_25 = arith.constant 0 : index
      %c0_26 = arith.constant 0 : index
      %47 = vector.load %arg7[%c0_25, %c0_26] : memref<104x1xf32, #tpu.memory_space<vmem>>, vector<104x1xf32>
      %48 = vector.shape_cast %47 : vector<104x1xf32> to vector<1x104x1xf32>
      %cst_27 = arith.constant dense<0.000000e+00> : vector<1xf32>
      %49 = vector.multi_reduction <add>, %48, %cst_27 [1, 2] : vector<1x104x1xf32> to vector<1xf32>
      %50 = vector.shape_cast %49 : vector<1xf32> to vector<1x1x1xf32>
      %51 = vector.extract %50[0, 0, 0] : f32 from vector<1x1x1xf32>
      %52 = vector.broadcast %51 : f32 to vector<8x128xf32>
      %53 = arith.addf %46, %52 : vector<8x128xf32>
      %c0_28 = arith.constant 0 : index
      %c0_29 = arith.constant 0 : index
      %54 = vector.load %arg5[%c0_28, %c0_29] : memref<8x128xf32, #tpu.memory_space<vmem>>, vector<8x128xf32>
      tpu.vector_store %arg5[%c0_28, %c0_29], %53 {strides = array<i32>} : memref<8x128xf32, #tpu.memory_space<vmem>>, vector<8x128xf32>,
    } else {
    }
    return
  }
  func.func @transform_0(%arg0: i32, %arg1: i32) -> (i32, i32) {
    %c1_i32 = arith.constant 1 : i32
    %0 = arith.muli %arg0, %c1_i32 : i32
    %1 = arith.addi %0, %arg1 : i32
    %c0_i32 = arith.constant 0 : i32
    %c0_i32_0 = arith.constant 0 : i32
    return %1, %c0_i32 : i32, i32
  }
  func.func @transform_1(%arg0: i32, %arg1: i32) -> (i32, i32) {
    %c1_i32 = arith.constant 1 : i32
    %0 = arith.muli %arg0, %c1_i32 : i32
    %1 = arith.addi %0, %arg1 : i32
    %c0_i32 = arith.constant 0 : i32
    %c0_i32_0 = arith.constant 0 : i32
    return %1, %c0_i32 : i32, i32
  }
  func.func @transform_2(%arg0: i32, %arg1: i32) -> (i32, i32) {
    %c0_i32 = arith.constant 0 : i32
    %c0_i32_0 = arith.constant 0 : i32
    return %arg0, %c0_i32 : i32, i32
  }
  func.func @transform_3(%arg0: i32, %arg1: i32) -> (i32, i32) {
    %c0_i32 = arith.constant 0 : i32
    %c0_i32_0 = arith.constant 0 : i32
    return %arg0, %c0_i32 : i32, i32
  }
}

</mosaic_0001>

<llo_original>
// kernel: tpu_custom_call.1
$region0: #{tpu_custom_call.1}
  #allocation0 [shape = 'u32[]', space=smem, size = 0x4, offset = 0x4, fixed_abs, tag = 'smem constant byte address 0x4 - core index']
  #allocation1 [shape = 'u32[144,128]{1,0:T(1,128)}', space=vmem, size = 0x12000, scoped, tag = 'internal scratch']
  #allocation2 [shape = 'f32[104,1]{1,0:T(8,128)}', space=vmem, size = 0xd000, scoped, tag = 'scratch operand']
  #allocation3 [shape = 'f32[104,1]{1,0:T(8,128)}', space=vmem, size = 0xd000, scoped, tag = 'scratch operand']
  %s0 = inlined_call_operand.vmem [shape: f32[208,16], index: 0, kind: input, shape index: {}]
  %s1 = inlined_call_operand.vmem [shape: s32[208,1], index: 1, kind: input, shape index: {}]
  %s2 = inlined_call_operand.hbm [shape: f32[16,128], index: 2, kind: output, shape index: {0}]
  %s3 = inlined_call_operand.hbm [shape: f32[16,128], index: 3, kind: output, shape index: {1}]
  %4 = xla_tuple %s2, %s3
  %s5 = sld [smem:[#allocation0]]
  $region57: #{tpu_custom_call.1} parent=0
    _
  %s7 = ssub.s32 1, %s5
  %s8 = scalar_select 0, %s7, %s5
  $region1: #{tpu_custom_call.1} parent=0
    #allocation4 [shape = 'u8[8192]{0}', space=vmem, size = 0x2000, scoped, tag = 'output window, operand 0']
    #allocation5 [shape = 's32[2]{0}', space=sflag, size = 0x8, scoped, tag = 'scoped memory for tpu_custom_call.1']
    #allocation6 [shape = 'u8[8192]{0}', space=vmem, size = 0x2000, scoped, tag = 'output window, operand 1']
    #allocation7 [shape = 's32[2]{0}', space=sflag, size = 0x8, scoped, tag = 'scoped memory for tpu_custom_call.1']
    %9 = vsyncpa [#allocation5], 0
    %s10 = scalar_lea.sflag [#allocation5], 1
    %11 = vsyncpa %s10, 0
    %12 = vsyncpa [#allocation7], 0
    %s13 = scalar_lea.sflag [#allocation7], 1
    %14 = vsyncpa %s13, 0
    loop: start=0, step=1, limit=4
    $region2: #{tpu_custom_call.1} parent=1 // loop_pre_header
      _
    $region3: #{tpu_custom_call.1} parent=1 // loop_header
      %s16 = sphi 0, %s20
      %p17 = scmp.ge.s32.totalorder %s16, 4
      %s23 = sphi 0, %s35
      %s24 = sphi 0, %s31
      %s25 = sphi 0, %s23
      %s26 = sphi 0, %s24
      %s27 = sphi 0, %s25
      %s28 = sphi 0, %s26
      %s40 = sphi 0, %s42
      %s43 = sphi 0, %s40
      %s44 = sphi 0, %s43
      %s60 = sphi 0, %s44
      %s68 = sphi 0, %s70
      %s71 = sphi 0, %s68
      %s72 = sphi 0, %s71
      %s88 = sphi 0, %s72
      %s94 = sphi 0, %s96
      %s97 = sphi 0, %s94
      %s98 = sphi 0, %s97
      %s114 = sphi 0, %s98
      %s120 = sphi 0, %s122
      %s123 = sphi 0, %s120
      %s124 = sphi 0, %s123
      %s140 = sphi 0, %s124
    $region4: #{tpu_custom_call.1} parent=1 // loop_header_branch
      %19 = sbr.rel (%p17) target = $region8
    $region5: #{tpu_custom_call.1} parent=1 // loop_body
      %s21 = ssub.s32 %s16, 1
      %s22 = ssub.s32 %s16, 2
      %s29 = sadd.s32 1, %s24
      %p30 = scmp.ge.s32.totalorder %s29, 1
      %s31 = scalar_select %p30, 0, %s29
      %s32 = sadd.s32 1, %s23
      %s33 = scalar_select %p30, %s32, %s23
      %p34 = scmp.ge.s32.totalorder %s33, 2
      %s35 = scalar_select %p34, 0, %s33
      %s36 = sadd.s32 %s23, %s24
      %s37 = sadd.s32 %s35, %s31
      %s38 = ssub.s32 %s36, %s37
      %p39 = scmp.eq.s32.totalorder %s38, 0
      %s41 = sadd.s32 %s40, 1
      %s42 = scalar_select %p39, %s40, %s41
      %p45 = pneg %p39
      %p46 = scmp.eq.s32.totalorder %s16, 1
      %p47 = por %p45, %p46
      %p48 = scmp.ne.s32.totalorder %s40, %s43
      %p49 = scmp.eq.s32.totalorder %s16, 0
      %p50 = por %p48, %p49
      %p51 = scmp.ne.s32.totalorder %s40, %s43
      %p52 = scmp.eq.s32.totalorder %s21, 1
      %p53 = por %p51, %p52
      %p54 = scmp.ne.s32.totalorder %s43, %s44
      %p55 = scmp.eq.s32.totalorder %s21, 0
      %p56 = por %p54, %p55
      %p57 = scmp.ne.s32.totalorder %s43, %s44
      %p58 = scmp.eq.s32.totalorder %s22, 1
      %p59 = por %p57, %p58
      %p61 = scmp.ne.s32.totalorder %s44, %s60
      %p62 = scmp.eq.s32.totalorder %s22, 0
      %p63 = por %p61, %p62
      %s64 = sadd.s32 %s23, %s24
      %s65 = sadd.s32 %s35, %s31
      %s66 = ssub.s32 %s64, %s65
      %p67 = scmp.eq.s32.totalorder %s66, 0
      %s69 = sadd.s32 %s68, 1
      %s70 = scalar_select %p67, %s68, %s69
      %p73 = pneg %p67
      %p74 = scmp.eq.s32.totalorder %s16, 1
      %p75 = por %p73, %p74
      %p76 = scmp.ne.s32.totalorder %s68, %s71
      %p77 = scmp.eq.s32.totalorder %s16, 0
      %p78 = por %p76, %p77
      %p79 = scmp.ne.s32.totalorder %s68, %s71
      %p80 = scmp.eq.s32.totalorder %s21, 1
      %p81 = por %p79, %p80
      %p82 = scmp.ne.s32.totalorder %s71, %s72
      %p83 = scmp.eq.s32.totalorder %s21, 0
      %p84 = por %p82, %p83
      %p85 = scmp.ne.s32.totalorder %s71, %s72
      %p86 = scmp.eq.s32.totalorder %s22, 1
      %p87 = por %p85, %p86
      %p89 = scmp.ne.s32.totalorder %s72, %s88
      %p90 = scmp.eq.s32.totalorder %s22, 0
      %p91 = por %p89, %p90
      %s92 = ssub.s32 %s23, %s35
      %p93 = scmp.eq.s32.totalorder %s92, 0
      %s95 = sadd.s32 %s94, 1
      %s96 = scalar_select %p93, %s94, %s95
      %p99 = pneg %p93
      %p100 = scmp.eq.s32.totalorder %s16, 1
      %p101 = por %p99, %p100
      %p102 = scmp.ne.s32.totalorder %s94, %s97
      %p103 = scmp.eq.s32.totalorder %s16, 0
      %p104 = por %p102, %p103
      %p105 = scmp.ne.s32.totalorder %s94, %s97
      %p106 = scmp.eq.s32.totalorder %s21, 1
      %p107 = por %p105, %p106
      %p108 = scmp.ne.s32.totalorder %s97, %s98
      %p109 = scmp.eq.s32.totalorder %s21, 0
      %p110 = por %p108, %p109
      %p111 = scmp.ne.s32.totalorder %s97, %s98
      %p112 = scmp.eq.s32.totalorder %s22, 1
      %p113 = por %p111, %p112
      %p115 = scmp.ne.s32.totalorder %s98, %s114
      %p116 = scmp.eq.s32.totalorder %s22, 0
      %p117 = por %p115, %p116
      %s118 = ssub.s32 %s23, %s35
      %p119 = scmp.eq.s32.totalorder %s118, 0
      %s121 = sadd.s32 %s120, 1
      %s122 = scalar_select %p119, %s120, %s121
      %p125 = pneg %p119
      %p126 = scmp.eq.s32.totalorder %s16, 1
      %p127 = por %p125, %p126
      %p128 = scmp.ne.s32.totalorder %s120, %s123
      %p129 = scmp.eq.s32.totalorder %s16, 0
      %p130 = por %p128, %p129
      %p131 = scmp.ne.s32.totalorder %s120, %s123
      %p132 = scmp.eq.s32.totalorder %s21, 1
      %p133 = por %p131, %p132
      %p134 = scmp.ne.s32.totalorder %s123, %s124
      %p135 = scmp.eq.s32.totalorder %s21, 0
      %p136 = por %p134, %p135
      %p137 = scmp.ne.s32.totalorder %s123, %s124
      %p138 = scmp.eq.s32.totalorder %s22, 1
      %p139 = por %p137, %p138
      %p141 = scmp.ne.s32.totalorder %s124, %s140
      %p142 = scmp.eq.s32.totalorder %s22, 0
      %p143 = por %p141, %p142
      %p144 = scmp.le.s32.totalorder 1, %s16
      %p145 = scmp.lt.s32.totalorder %s16, 3
      %p146 = pnand %p144, %p145
      %p147 = pneg %p146
      // Predicated region
      $region9: #{tpu_custom_call.1} parent=5 // pred_check
        _
      $region10: #{tpu_custom_call.1} parent=5 // pred_check_branch
        %149 = sbr.rel (%p146) target = $region12
      $region11: #{tpu_custom_call.1} parent=5 // pred_region
        %s150 = ssub.s32 %s16, 1
      $region12: #{tpu_custom_call.1} parent=5 // pred_fallthru
        _
      %p151 = scmp.lt.s32.totalorder %s16, 2
      // Predicated region
      $region13: #{tpu_custom_call.1} parent=5 // pred_check
        %p152 = pneg %p151
      $region14: #{tpu_custom_call.1} parent=5 // pred_check_branch
        %154 = sbr.rel (%p152) target = $region16
      $region15: #{tpu_custom_call.1} parent=5 // pred_region
        // Predicated region
        $region17: #{tpu_custom_call.1} parent=15 // pred_check
          %p155 = pneg %p50
        $region18: #{tpu_custom_call.1} parent=15 // pred_check_branch
          %157 = sbr.rel (%p155) target = $region20
        $region19: #{tpu_custom_call.1} parent=15 // pred_region
          %s158 = sadd.s32 %s23, %s24
          %s159 = smul.u32 13, %s158
          %p160 = scmp.lt.s32.totalorder %s159, 25
          %s161 = scalar_select %p160, %s159, 25
          %s162 = smul.addr %s161, 8
          %s163 = scalar_lea.vmem %s0, %s162
          %s164 = sadd.s32 %s23, %s24
          %s165 = smul.u32 13, %s164
        $region20: #{tpu_custom_call.1} parent=15 // pred_fallthru
          _
        // Predicated region
        $region21: #{tpu_custom_call.1} parent=15 // pred_check
          %p166 = pneg %p78
        $region22: #{tpu_custom_call.1} parent=15 // pred_check_branch
          %168 = sbr.rel (%p166) target = $region24
        $region23: #{tpu_custom_call.1} parent=15 // pred_region
          %s169 = sadd.s32 %s23, %s24
          %s170 = smul.u32 13, %s169
          %p171 = scmp.lt.s32.totalorder %s170, 25
          %s172 = scalar_select %p171, %s170, 25
          %s173 = smul.addr %s172, 8
          %s174 = scalar_lea.vmem %s1, %s173
          %s175 = sadd.s32 %s23, %s24
          %s176 = smul.u32 13, %s175
        $region24: #{tpu_custom_call.1} parent=15 // pred_fallthru
          _
      $region16: #{tpu_custom_call.1} parent=5 // pred_fallthru
        _
      %p177 = scmp.le.s32.totalorder 1, %s16
      %p178 = scmp.lt.s32.totalorder %s16, 3
      %p179 = pnand %p177, %p178
      %p180 = pneg %p179
      // Predicated region
      $region25: #{tpu_custom_call.1} parent=5 // pred_check
        _
      $region26: #{tpu_custom_call.1} parent=5 // pred_check_branch
        %182 = sbr.rel (%p179) target = $region28
      $region27: #{tpu_custom_call.1} parent=5 // pred_region
        %s183 = ssub.s32 %s16, 1
        %s184 = sadd.s32 %s25, %s26
        %s185 = smul.u32 13, %s184
        %p186 = scmp.lt.s32.totalorder %s185, 25
        %s187 = scalar_select %p186, %s185, 25
        %s188 = smul.addr %s187, 8
        %s189 = scalar_lea.vmem %s0, %s188
        %p190 = pneg %p56
        %p191 = pneg %p53
        %s192 = sadd.s32 %s25, %s26
        %s193 = smul.u32 13, %s192
        %p194 = scmp.lt.s32.totalorder %s193, 25
        %s195 = scalar_select %p194, %s193, 25
        %s196 = smul.addr %s195, 8
        %s197 = scalar_lea.vmem %s1, %s196
        %p198 = pneg %p84
        %p199 = pneg %p81
        %p200 = pneg %p110
        %p201 = pneg %p107
        %s202 = sand.u32 %s97, 1
        %s203 = scalar_lea.sflag [#allocation5], %s202
        %s204 = sand.u32 %s97, 1
        %s205 = smul.addr %s204, 8
        %s206 = scalar_lea.vmem [#allocation4], %s205
        %p207 = pneg %p136
        %p208 = pneg %p133
        %s209 = sand.u32 %s123, 1
        %s210 = scalar_lea.sflag [#allocation7], %s209
        %s211 = sand.u32 %s123, 1
        %s212 = smul.addr %s211, 8
        %s213 = scalar_lea.vmem [#allocation6], %s212
        %s214 = sadd.s32 %s25, %s26
        %s215 = smul.u32 13, %s214
        %p216 = scmp.lt.s32.totalorder %s215, 25
        %s217 = scalar_select %p216, %s215, 25
        %s218 = smul.addr %s217, 8
        %s219 = scalar_lea.vmem %s0, %s218
        %s220 = sadd.s32 %s25, %s26
        %s221 = smul.u32 13, %s220
        %s222 = sadd.s32 %s25, %s26
        %s223 = smul.u32 13, %s222
        %p224 = scmp.lt.s32.totalorder %s223, 25
        %s225 = scalar_select %p224, %s223, 25
        %s226 = smul.addr %s225, 8
        %s227 = scalar_lea.vmem %s1, %s226
        %s228 = sadd.s32 %s25, %s26
        %s229 = smul.u32 13, %s228
        %p230 = scmp.eq.s32.totalorder %s26, 0
        // Predicated region
        $region29: #{tpu_custom_call.1} parent=27 // pred_check
          %p231 = pneg %p230
        $region30: #{tpu_custom_call.1} parent=27 // pred_check_branch
          %233 = sbr.rel (%p231) target = $region32
        $region31: #{tpu_custom_call.1} parent=27 // pred_region
          %vm234 = vcmask 7168
          %235 = vst.msk [vmem:[#allocation2] sm:$0xff] %vm234, 0.0
          %236 = vst.msk [vmem:[#allocation2 + $0x8] sm:$0xff] %vm234, 0.0
          %237 = vst.msk [vmem:[#allocation2 + $0x10] sm:$0xff] %vm234, 0.0
          %238 = vst.msk [vmem:[#allocation2 + $0x18] sm:$0xff] %vm234, 0.0
          %239 = vst.msk [vmem:[#allocation2 + $0x20] sm:$0xff] %vm234, 0.0
          %240 = vst.msk [vmem:[#allocation2 + $0x28] sm:$0xff] %vm234, 0.0
          %241 = vst.msk [vmem:[#allocation2 + $0x30] sm:$0xff] %vm234, 0.0
          %242 = vst.msk [vmem:[#allocation2 + $0x38] sm:$0xff] %vm234, 0.0
          %243 = vst.msk [vmem:[#allocation2 + $0x40] sm:$0xff] %vm234, 0.0
          %244 = vst.msk [vmem:[#allocation2 + $0x48] sm:$0xff] %vm234, 0.0
          %245 = vst.msk [vmem:[#allocation2 + $0x50] sm:$0xff] %vm234, 0.0
          %246 = vst.msk [vmem:[#allocation2 + $0x58] sm:$0xff] %vm234, 0.0
          %247 = vst.msk [vmem:[#allocation2 + $0x60] sm:$0xff] %vm234, 0.0
          %248 = vst.msk [vmem:[#allocation3] sm:$0xff] %vm234, 0.0
          %249 = vst.msk [vmem:[#allocation3 + $0x8] sm:$0xff] %vm234, 0.0
          %250 = vst.msk [vmem:[#allocation3 + $0x10] sm:$0xff] %vm234, 0.0
          %251 = vst.msk [vmem:[#allocation3 + $0x18] sm:$0xff] %vm234, 0.0
          %252 = vst.msk [vmem:[#allocation3 + $0x20] sm:$0xff] %vm234, 0.0
          %253 = vst.msk [vmem:[#allocation3 + $0x28] sm:$0xff] %vm234, 0.0
          %254 = vst.msk [vmem:[#allocation3 + $0x30] sm:$0xff] %vm234, 0.0
          %255 = vst.msk [vmem:[#allocation3 + $0x38] sm:$0xff] %vm234, 0.0
          %256 = vst.msk [vmem:[#allocation3 + $0x40] sm:$0xff] %vm234, 0.0
          %257 = vst.msk [vmem:[#allocation3 + $0x48] sm:$0xff] %vm234, 0.0
          %258 = vst.msk [vmem:[#allocation3 + $0x50] sm:$0xff] %vm234, 0.0
          %259 = vst.msk [vmem:[#allocation3 + $0x58] sm:$0xff] %vm234, 0.0
          %260 = vst.msk [vmem:[#allocation3 + $0x60] sm:$0xff] %vm234, 0.0
        $region32: #{tpu_custom_call.1} parent=27 // pred_fallthru
          _
        %v261 = vld [vmem:[%s219] sm:$0xff]
        %v262 = vld [vmem:[%s219 + $0x8] sm:$0xff]
        %v263 = vld [vmem:[%s219 + $0x10] sm:$0xff]
        %v264 = vld [vmem:[%s219 + $0x18] sm:$0xff]
        %v265 = vld [vmem:[%s219 + $0x20] sm:$0xff]
        %v266 = vld [vmem:[%s219 + $0x28] sm:$0xff]
        %v267 = vld [vmem:[%s219 + $0x30] sm:$0xff]
        %v268 = vld [vmem:[%s219 + $0x38] sm:$0xff]
        %v269 = vld [vmem:[%s219 + $0x40] sm:$0xff]
        %v270 = vld [vmem:[%s219 + $0x48] sm:$0xff]
        %v271 = vld [vmem:[%s219 + $0x50] sm:$0xff]
        %v272 = vld [vmem:[%s219 + $0x58] sm:$0xff]
        %v273 = vld [vmem:[%s219 + $0x60] sm:$0xff]
        %v274 = vld [vmem:[%s227] sm:$0xff]
        %v275 = vld [vmem:[%s227 + $0x8] sm:$0xff]
        %v276 = vld [vmem:[%s227 + $0x10] sm:$0xff]
        %v277 = vld [vmem:[%s227 + $0x18] sm:$0xff]
        %v278 = vld [vmem:[%s227 + $0x20] sm:$0xff]
        %v279 = vld [vmem:[%s227 + $0x28] sm:$0xff]
        %v280 = vld [vmem:[%s227 + $0x30] sm:$0xff]
        %v281 = vld [vmem:[%s227 + $0x38] sm:$0xff]
        %v282 = vld [vmem:[%s227 + $0x40] sm:$0xff]
        %v283 = vld [vmem:[%s227 + $0x48] sm:$0xff]
        %v284 = vld [vmem:[%s227 + $0x50] sm:$0xff]
        %v285 = vld [vmem:[%s227 + $0x58] sm:$0xff]
        %v286 = vld [vmem:[%s227 + $0x60] sm:$0xff]
        %vm287 = vcmp.ne.s32.totalorder %v274, 4294967295
        %vm288 = vcmp.ne.s32.totalorder %v275, 4294967295
        %vm289 = vcmp.ne.s32.totalorder %v276, 4294967295
        %vm290 = vcmp.ne.s32.totalorder %v277, 4294967295
        %vm291 = vcmp.ne.s32.totalorder %v278, 4294967295
        %vm292 = vcmp.ne.s32.totalorder %v279, 4294967295
        %vm293 = vcmp.ne.s32.totalorder %v280, 4294967295
        %vm294 = vcmp.ne.s32.totalorder %v281, 4294967295
        %vm295 = vcmp.ne.s32.totalorder %v282, 4294967295
        %vm296 = vcmp.ne.s32.totalorder %v283, 4294967295
        %vm297 = vcmp.ne.s32.totalorder %v284, 4294967295
        %vm298 = vcmp.ne.s32.totalorder %v285, 4294967295
        %vm299 = vcmp.ne.s32.totalorder %v286, 4294967295
        %v300 = vsel %vm287, 1, 0
        %v301 = vsel %vm288, 1, 0
        %v302 = vsel %vm289, 1, 0
        %v303 = vsel %vm290, 1, 0
        %v304 = vsel %vm291, 1, 0
        %v305 = vsel %vm292, 1, 0
        %v306 = vsel %vm293, 1, 0
        %v307 = vsel %vm294, 1, 0
        %v308 = vsel %vm295, 1, 0
        %v309 = vsel %vm296, 1, 0
        %v310 = vsel %vm297, 1, 0
        %v311 = vsel %vm298, 1, 0
        %v312 = vsel %vm299, 1, 0
        %v313 = vcvt.s32.f32 %v300
        %v314 = vcvt.s32.f32 %v301
        %v315 = vcvt.s32.f32 %v302
        %v316 = vcvt.s32.f32 %v303
        %v317 = vcvt.s32.f32 %v304
        %v318 = vcvt.s32.f32 %v305
        %v319 = vcvt.s32.f32 %v306
        %v320 = vcvt.s32.f32 %v307
        %v321 = vcvt.s32.f32 %v308
        %v322 = vcvt.s32.f32 %v309
        %v323 = vcvt.s32.f32 %v310
        %v324 = vcvt.s32.f32 %v311
        %v325 = vcvt.s32.f32 %v312
        %vm326 = vcmask 130048
        %v327 = vsel %vm326, %v261, -inf
        %328 = vmax.xlane.f32.xlu0 %v327
        %v329 = vpop.xlane.xlu0 %328
        %v330 = vsel %vm326, %v262, -inf
        %331 = vmax.xlane.f32.xlu0 %v330
        %v332 = vpop.xlane.xlu0 %331
        %v333 = vsel %vm326, %v263, -inf
        %334 = vmax.xlane.f32.xlu0 %v333
        %v335 = vpop.xlane.xlu0 %334
        %v336 = vsel %vm326, %v264, -inf
        %337 = vmax.xlane.f32.xlu0 %v336
        %v338 = vpop.xlane.xlu0 %337
        %v339 = vsel %vm326, %v265, -inf
        %340 = vmax.xlane.f32.xlu0 %v339
        %v341 = vpop.xlane.xlu0 %340
        %v342 = vsel %vm326, %v266, -inf
        %343 = vmax.xlane.f32.xlu0 %v342
        %v344 = vpop.xlane.xlu0 %343
        %v345 = vsel %vm326, %v267, -inf
        %346 = vmax.xlane.f32.xlu0 %v345
        %v347 = vpop.xlane.xlu0 %346
        %v348 = vsel %vm326, %v268, -inf
        %349 = vmax.xlane.f32.xlu0 %v348
        %v350 = vpop.xlane.xlu0 %349
        %v351 = vsel %vm326, %v269, -inf
        %352 = vmax.xlane.f32.xlu0 %v351
        %v353 = vpop.xlane.xlu0 %352
        %v354 = vsel %vm326, %v270, -inf
        %355 = vmax.xlane.f32.xlu0 %v354
        %v356 = vpop.xlane.xlu0 %355
        %v357 = vsel %vm326, %v271, -inf
        %358 = vmax.xlane.f32.xlu0 %v357
        %v359 = vpop.xlane.xlu0 %358
        %v360 = vsel %vm326, %v272, -inf
        %361 = vmax.xlane.f32.xlu0 %v360
        %v362 = vpop.xlane.xlu0 %361
        %v363 = vsel %vm326, %v273, -inf
        %364 = vmax.xlane.f32.xlu0 %v363
        %v365 = vpop.xlane.xlu0 %364
        %v366 = vsub.f32 %v261, %v329
        %v367 = vsub.f32 %v262, %v332
        %v368 = vsub.f32 %v263, %v335
        %v369 = vsub.f32 %v264, %v338
        %v370 = vsub.f32 %v265, %v341
        %v371 = vsub.f32 %v266, %v344
        %v372 = vsub.f32 %v267, %v347
        %v373 = vsub.f32 %v268, %v350
        %v374 = vsub.f32 %v269, %v353
        %v375 = vsub.f32 %v270, %v356
        %v376 = vsub.f32 %v271, %v359
        %v377 = vsub.f32 %v272, %v362
        %v378 = vsub.f32 %v273, %v365
        %v379 = vmul.f32 %v366, 1.442695
        %v380 = vpow.pop %v379
        %v381 = vmul.f32 %v367, 1.442695
        %v382 = vpow.pop %v381
        %v383 = vmul.f32 %v368, 1.442695
        %v384 = vpow.pop %v383
        %v385 = vmul.f32 %v369, 1.442695
        %v386 = vpow.pop %v385
        %v387 = vmul.f32 %v370, 1.442695
        %v388 = vpow.pop %v387
        %v389 = vmul.f32 %v371, 1.442695
        %v390 = vpow.pop %v389
        %v391 = vmul.f32 %v372, 1.442695
        %v392 = vpow.pop %v391
        %v393 = vmul.f32 %v373, 1.442695
        %v394 = vpow.pop %v393
        %v395 = vmul.f32 %v374, 1.442695
        %v396 = vpow.pop %v395
        %v397 = vmul.f32 %v375, 1.442695
        %v398 = vpow.pop %v397
        %v399 = vmul.f32 %v376, 1.442695
        %v400 = vpow.pop %v399
        %v401 = vmul.f32 %v377, 1.442695
        %v402 = vpow.pop %v401
        %v403 = vmul.f32 %v378, 1.442695
        %v404 = vpow.pop %v403
        %v405 = vsel %vm326, %v380, 0.0
        %406 = vadd.xlane.f32.xlu0 %v405
        %v407 = vpop.xlane.xlu0 %406
        %v408 = vsel %vm326, %v382, 0.0
        %409 = vadd.xlane.f32.xlu0 %v408
        %v410 = vpop.xlane.xlu0 %409
        %v411 = vsel %vm326, %v384, 0.0
        %412 = vadd.xlane.f32.xlu0 %v411
        %v413 = vpop.xlane.xlu0 %412
        %v414 = vsel %vm326, %v386, 0.0
        %415 = vadd.xlane.f32.xlu0 %v414
        %v416 = vpop.xlane.xlu0 %415
        %v417 = vsel %vm326, %v388, 0.0
        %418 = vadd.xlane.f32.xlu0 %v417
        %v419 = vpop.xlane.xlu0 %418
        %v420 = vsel %vm326, %v390, 0.0
        %421 = vadd.xlane.f32.xlu0 %v420
        %v422 = vpop.xlane.xlu0 %421
        %v423 = vsel %vm326, %v392, 0.0
        %424 = vadd.xlane.f32.xlu0 %v423
        %v425 = vpop.xlane.xlu0 %424
        %v426 = vsel %vm326, %v394, 0.0
        %427 = vadd.xlane.f32.xlu0 %v426
        %v428 = vpop.xlane.xlu0 %427
        %v429 = vsel %vm326, %v396, 0.0
        %430 = vadd.xlane.f32.xlu0 %v429
        %v431 = vpop.xlane.xlu0 %430
        %v432 = vsel %vm326, %v398, 0.0
        %433 = vadd.xlane.f32.xlu0 %v432
        %v434 = vpop.xlane.xlu0 %433
        %v435 = vsel %vm326, %v400, 0.0
        %436 = vadd.xlane.f32.xlu0 %v435
        %v437 = vpop.xlane.xlu0 %436
        %v438 = vsel %vm326, %v402, 0.0
        %439 = vadd.xlane.f32.xlu0 %v438
        %v440 = vpop.xlane.xlu0 %439
        %v441 = vsel %vm326, %v404, 0.0
        %442 = vadd.xlane.f32.xlu0 %v441
        %v443 = vpop.xlane.xlu0 %442
        %v444 = vlog2.pop %v407
        %v445 = vmul.f32 %v444, 0.6931472
        %v446 = vlog2.pop %v410
        %v447 = vmul.f32 %v446, 0.6931472
        %v448 = vlog2.pop %v413
        %v449 = vmul.f32 %v448, 0.6931472
        %v450 = vlog2.pop %v416
        %v451 = vmul.f32 %v450, 0.6931472
        %v452 = vlog2.pop %v419
        %v453 = vmul.f32 %v452, 0.6931472
        %v454 = vlog2.pop %v422
        %v455 = vmul.f32 %v454, 0.6931472
        %v456 = vlog2.pop %v425
        %v457 = vmul.f32 %v456, 0.6931472
        %v458 = vlog2.pop %v428
        %v459 = vmul.f32 %v458, 0.6931472
        %v460 = vlog2.pop %v431
        %v461 = vmul.f32 %v460, 0.6931472
        %v462 = vlog2.pop %v434
        %v463 = vmul.f32 %v462, 0.6931472
        %v464 = vlog2.pop %v437
        %v465 = vmul.f32 %v464, 0.6931472
        %v466 = vlog2.pop %v440
        %v467 = vmul.f32 %v466, 0.6931472
        %v468 = vlog2.pop %v443
        %v469 = vmul.f32 %v468, 0.6931472
        %v470 = vadd.f32 %v329, %v445
        %v471 = vadd.f32 %v332, %v447
        %v472 = vadd.f32 %v335, %v449
        %v473 = vadd.f32 %v338, %v451
        %v474 = vadd.f32 %v341, %v453
        %v475 = vadd.f32 %v344, %v455
        %v476 = vadd.f32 %v347, %v457
        %v477 = vadd.f32 %v350, %v459
        %v478 = vadd.f32 %v353, %v461
        %v479 = vadd.f32 %v356, %v463
        %v480 = vadd.f32 %v359, %v465
        %v481 = vadd.f32 %v362, %v467
        %v482 = vadd.f32 %v365, %v469
        %v483 = vlaneseq
        %v484 = vand.u32 %v483, 127
        %485 = vset.pattern.permute.xlu0 0
        %486 = vperm.xlu0 %485, %v274
        %v487 = vpop.permute.xlu0 %486
        %488 = vset.pattern.permute.xlu0 0
        %489 = vperm.xlu0 %488, %v275
        %v490 = vpop.permute.xlu0 %489
        %491 = vset.pattern.permute.xlu0 0
        %492 = vperm.xlu0 %491, %v276
        %v493 = vpop.permute.xlu0 %492
        %494 = vset.pattern.permute.xlu0 0
        %495 = vperm.xlu0 %494, %v277
        %v496 = vpop.permute.xlu0 %495
        %497 = vset.pattern.permute.xlu0 0
        %498 = vperm.xlu0 %497, %v278
        %v499 = vpop.permute.xlu0 %498
        %500 = vset.pattern.permute.xlu0 0
        %501 = vperm.xlu0 %500, %v279
        %v502 = vpop.permute.xlu0 %501
        %503 = vset.pattern.permute.xlu0 0
        %504 = vperm.xlu0 %503, %v280
        %v505 = vpop.permute.xlu0 %504
        %506 = vset.pattern.permute.xlu0 0
        %507 = vperm.xlu0 %506, %v281
        %v508 = vpop.permute.xlu0 %507
        %509 = vset.pattern.permute.xlu0 0
        %510 = vperm.xlu0 %509, %v282
        %v511 = vpop.permute.xlu0 %510
        %512 = vset.pattern.permute.xlu0 0
        %513 = vperm.xlu0 %512, %v283
        %v514 = vpop.permute.xlu0 %513
        %515 = vset.pattern.permute.xlu0 0
        %516 = vperm.xlu0 %515, %v284
        %v517 = vpop.permute.xlu0 %516
        %518 = vset.pattern.permute.xlu0 0
        %519 = vperm.xlu0 %518, %v285
        %v520 = vpop.permute.xlu0 %519
        %521 = vset.pattern.permute.xlu0 0
        %522 = vperm.xlu0 %521, %v286
        %v523 = vpop.permute.xlu0 %522
        %vm524 = vcmp.eq.s32.totalorder %v484, %v487
        %vm525 = vcmp.eq.s32.totalorder %v484, %v490
        %vm526 = vcmp.eq.s32.totalorder %v484, %v493
        %vm527 = vcmp.eq.s32.totalorder %v484, %v496
        %vm528 = vcmp.eq.s32.totalorder %v484, %v499
        %vm529 = vcmp.eq.s32.totalorder %v484, %v502
        %vm530 = vcmp.eq.s32.totalorder %v484, %v505
        %vm531 = vcmp.eq.s32.totalorder %v484, %v508
        %vm532 = vcmp.eq.s32.totalorder %v484, %v511
        %vm533 = vcmp.eq.s32.totalorder %v484, %v514
        %vm534 = vcmp.eq.s32.totalorder %v484, %v517
        %vm535 = vcmp.eq.s32.totalorder %v484, %v520
        %vm536 = vcmp.eq.s32.totalorder %v484, %v523
        %v537 = vsel %vm524, %v261, 0.0
        %v538 = vsel %vm525, %v262, 0.0
        %v539 = vsel %vm526, %v263, 0.0
        %v540 = vsel %vm527, %v264, 0.0
        %v541 = vsel %vm528, %v265, 0.0
        %v542 = vsel %vm529, %v266, 0.0
        %v543 = vsel %vm530, %v267, 0.0
        %v544 = vsel %vm531, %v268, 0.0
        %v545 = vsel %vm532, %v269, 0.0
        %v546 = vsel %vm533, %v270, 0.0
        %v547 = vsel %vm534, %v271, 0.0
        %v548 = vsel %vm535, %v272, 0.0
        %v549 = vsel %vm536, %v273, 0.0
        %v550 = vsel %vm326, %v537, 0.0
        %551 = vadd.xlane.f32.xlu0 %v550
        %v552 = vpop.xlane.xlu0 %551
        %v553 = vsel %vm326, %v538, 0.0
        %554 = vadd.xlane.f32.xlu0 %v553
        %v555 = vpop.xlane.xlu0 %554
        %v556 = vsel %vm326, %v539, 0.0
        %557 = vadd.xlane.f32.xlu0 %v556
        %v558 = vpop.xlane.xlu0 %557
        %v559 = vsel %vm326, %v540, 0.0
        %560 = vadd.xlane.f32.xlu0 %v559
        %v561 = vpop.xlane.xlu0 %560
        %v562 = vsel %vm326, %v541, 0.0
        %563 = vadd.xlane.f32.xlu0 %v562
        %v564 = vpop.xlane.xlu0 %563
        %v565 = vsel %vm326, %v542, 0.0
        %566 = vadd.xlane.f32.xlu0 %v565
        %v567 = vpop.xlane.xlu0 %566
        %v568 = vsel %vm326, %v543, 0.0
        %569 = vadd.xlane.f32.xlu0 %v568
        %v570 = vpop.xlane.xlu0 %569
        %v571 = vsel %vm326, %v544, 0.0
        %572 = vadd.xlane.f32.xlu0 %v571
        %v573 = vpop.xlane.xlu0 %572
        %v574 = vsel %vm326, %v545, 0.0
        %575 = vadd.xlane.f32.xlu0 %v574
        %v576 = vpop.xlane.xlu0 %575
        %v577 = vsel %vm326, %v546, 0.0
        %578 = vadd.xlane.f32.xlu0 %v577
        %v579 = vpop.xlane.xlu0 %578
        %v580 = vsel %vm326, %v547, 0.0
        %581 = vadd.xlane.f32.xlu0 %v580
        %v582 = vpop.xlane.xlu0 %581
        %v583 = vsel %vm326, %v548, 0.0
        %584 = vadd.xlane.f32.xlu0 %v583
        %v585 = vpop.xlane.xlu0 %584
        %v586 = vsel %vm326, %v549, 0.0
        %587 = vadd.xlane.f32.xlu0 %v586
        %v588 = vpop.xlane.xlu0 %587
        %v589 = vsub.f32 %v470, %v552
        %v590 = vsub.f32 %v471, %v555
        %v591 = vsub.f32 %v472, %v558
        %v592 = vsub.f32 %v473, %v561
        %v593 = vsub.f32 %v474, %v564
        %v594 = vsub.f32 %v475, %v567
        %v595 = vsub.f32 %v476, %v570
        %v596 = vsub.f32 %v477, %v573
        %v597 = vsub.f32 %v478, %v576
        %v598 = vsub.f32 %v479, %v579
        %v599 = vsub.f32 %v480, %v582
        %v600 = vsub.f32 %v481, %v585
        %v601 = vsub.f32 %v482, %v588
        %v602 = vsel %vm287, %v589, 0.0
        %v603 = vsel %vm288, %v590, 0.0
        %v604 = vsel %vm289, %v591, 0.0
        %v605 = vsel %vm290, %v592, 0.0
        %v606 = vsel %vm291, %v593, 0.0
        %v607 = vsel %vm292, %v594, 0.0
        %v608 = vsel %vm293, %v595, 0.0
        %v609 = vsel %vm294, %v596, 0.0
        %v610 = vsel %vm295, %v597, 0.0
        %v611 = vsel %vm296, %v598, 0.0
        %v612 = vsel %vm297, %v599, 0.0
        %v613 = vsel %vm298, %v600, 0.0
        %v614 = vsel %vm299, %v601, 0.0
        %v615 = vld [vmem:[#allocation2] sm:$0xff]
        %v616 = vld [vmem:[#allocation2 + $0x8] sm:$0xff]
        %v617 = vld [vmem:[#allocation2 + $0x10] sm:$0xff]
        %v618 = vld [vmem:[#allocation2 + $0x18] sm:$0xff]
        %v619 = vld [vmem:[#allocation2 + $0x20] sm:$0xff]
        %v620 = vld [vmem:[#allocation2 + $0x28] sm:$0xff]
        %v621 = vld [vmem:[#allocation2 + $0x30] sm:$0xff]
        %v622 = vld [vmem:[#allocation2 + $0x38] sm:$0xff]
        %v623 = vld [vmem:[#allocation2 + $0x40] sm:$0xff]
        %v624 = vld [vmem:[#allocation2 + $0x48] sm:$0xff]
        %v625 = vld [vmem:[#allocation2 + $0x50] sm:$0xff]
        %v626 = vld [vmem:[#allocation2 + $0x58] sm:$0xff]
        %v627 = vld [vmem:[#allocation2 + $0x60] sm:$0xff]
        %v628 = vadd.f32 %v615, %v602
        %v629 = vadd.f32 %v616, %v603
        %v630 = vadd.f32 %v617, %v604
        %v631 = vadd.f32 %v618, %v605
        %v632 = vadd.f32 %v619, %v606
        %v633 = vadd.f32 %v620, %v607
        %v634 = vadd.f32 %v621, %v608
        %v635 = vadd.f32 %v622, %v609
        %v636 = vadd.f32 %v623, %v610
        %v637 = vadd.f32 %v624, %v611
        %v638 = vadd.f32 %v625, %v612
        %v639 = vadd.f32 %v626, %v613
        %v640 = vadd.f32 %v627, %v614
        %vm641 = vcmask 7168
        %642 = vst.msk [vmem:[#allocation2] sm:$0xff] %vm641, %v628
        %643 = vst.msk [vmem:[#allocation2 + $0x8] sm:$0xff] %vm641, %v629
        %644 = vst.msk [vmem:[#allocation2 + $0x10] sm:$0xff] %vm641, %v630
        %645 = vst.msk [vmem:[#allocation2 + $0x18] sm:$0xff] %vm641, %v631
        %646 = vst.msk [vmem:[#allocation2 + $0x20] sm:$0xff] %vm641, %v632
        %647 = vst.msk [vmem:[#allocation2 + $0x28] sm:$0xff] %vm641, %v633
        %648 = vst.msk [vmem:[#allocation2 + $0x30] sm:$0xff] %vm641, %v634
        %649 = vst.msk [vmem:[#allocation2 + $0x38] sm:$0xff] %vm641, %v635
        %650 = vst.msk [vmem:[#allocation2 + $0x40] sm:$0xff] %vm641, %v636
        %651 = vst.msk [vmem:[#allocation2 + $0x48] sm:$0xff] %vm641, %v637
        %652 = vst.msk [vmem:[#allocation2 + $0x50] sm:$0xff] %vm641, %v638
        %653 = vst.msk [vmem:[#allocation2 + $0x58] sm:$0xff] %vm641, %v639
        %654 = vst.msk [vmem:[#allocation2 + $0x60] sm:$0xff] %vm641, %v640
        %v655 = vld [vmem:[#allocation3] sm:$0xff]
        %v656 = vld [vmem:[#allocation3 + $0x8] sm:$0xff]
        %v657 = vld [vmem:[#allocation3 + $0x10] sm:$0xff]
        %v658 = vld [vmem:[#allocation3 + $0x18] sm:$0xff]
        %v659 = vld [vmem:[#allocation3 + $0x20] sm:$0xff]
        %v660 = vld [vmem:[#allocation3 + $0x28] sm:$0xff]
        %v661 = vld [vmem:[#allocation3 + $0x30] sm:$0xff]
        %v662 = vld [vmem:[#allocation3 + $0x38] sm:$0xff]
        %v663 = vld [vmem:[#allocation3 + $0x40] sm:$0xff]
        %v664 = vld [vmem:[#allocation3 + $0x48] sm:$0xff]
        %v665 = vld [vmem:[#allocation3 + $0x50] sm:$0xff]
        %v666 = vld [vmem:[#allocation3 + $0x58] sm:$0xff]
        %v667 = vld [vmem:[#allocation3 + $0x60] sm:$0xff]
        %v668 = vadd.f32 %v655, %v313
        %v669 = vadd.f32 %v656, %v314
        %v670 = vadd.f32 %v657, %v315
        %v671 = vadd.f32 %v658, %v316
        %v672 = vadd.f32 %v659, %v317
        %v673 = vadd.f32 %v660, %v318
        %v674 = vadd.f32 %v661, %v319
        %v675 = vadd.f32 %v662, %v320
        %v676 = vadd.f32 %v663, %v321
        %v677 = vadd.f32 %v664, %v322
        %v678 = vadd.f32 %v665, %v323
        %v679 = vadd.f32 %v666, %v324
        %v680 = vadd.f32 %v667, %v325
        %681 = vst.msk [vmem:[#allocation3] sm:$0xff] %vm641, %v668
        %682 = vst.msk [vmem:[#allocation3 + $0x8] sm:$0xff] %vm641, %v669
        %683 = vst.msk [vmem:[#allocation3 + $0x10] sm:$0xff] %vm641, %v670
        %684 = vst.msk [vmem:[#allocation3 + $0x18] sm:$0xff] %vm641, %v671
        %685 = vst.msk [vmem:[#allocation3 + $0x20] sm:$0xff] %vm641, %v672
        %686 = vst.msk [vmem:[#allocation3 + $0x28] sm:$0xff] %vm641, %v673
        %687 = vst.msk [vmem:[#allocation3 + $0x30] sm:$0xff] %vm641, %v674
        %688 = vst.msk [vmem:[#allocation3 + $0x38] sm:$0xff] %vm641, %v675
        %689 = vst.msk [vmem:[#allocation3 + $0x40] sm:$0xff] %vm641, %v676
        %690 = vst.msk [vmem:[#allocation3 + $0x48] sm:$0xff] %vm641, %v677
        %691 = vst.msk [vmem:[#allocation3 + $0x50] sm:$0xff] %vm641, %v678
        %692 = vst.msk [vmem:[#allocation3 + $0x58] sm:$0xff] %vm641, %v679
        %693 = vst.msk [vmem:[#allocation3 + $0x60] sm:$0xff] %vm641, %v680
        // Predicated region
        $region33: #{tpu_custom_call.1} parent=27 // pred_check
          %p694 = pneg %p230
        $region34: #{tpu_custom_call.1} parent=27 // pred_check_branch
          %696 = sbr.rel (%p694) target = $region36
        $region35: #{tpu_custom_call.1} parent=27 // pred_region
          %v697 = vld [vmem:[#allocation2] sm:$0xff]
          %v698 = vld [vmem:[#allocation2 + $0x8] sm:$0xff]
          %v699 = vld [vmem:[#allocation2 + $0x10] sm:$0xff]
          %v700 = vld [vmem:[#allocation2 + $0x18] sm:$0xff]
          %v701 = vld [vmem:[#allocation2 + $0x20] sm:$0xff]
          %v702 = vld [vmem:[#allocation2 + $0x28] sm:$0xff]
          %v703 = vld [vmem:[#allocation2 + $0x30] sm:$0xff]
          %v704 = vld [vmem:[#allocation2 + $0x38] sm:$0xff]
          %v705 = vld [vmem:[#allocation2 + $0x40] sm:$0xff]
          %v706 = vld [vmem:[#allocation2 + $0x48] sm:$0xff]
          %v707 = vld [vmem:[#allocation2 + $0x50] sm:$0xff]
          %v708 = vld [vmem:[#allocation2 + $0x58] sm:$0xff]
          %v709 = vld [vmem:[#allocation2 + $0x60] sm:$0xff]
          %v710 = vsel %vm641, %v697, 0.0
          %v711 = vsel %vm641, %v698, 0.0
          %v712 = vadd.f32 %v710, %v711
          %v713 = vsel %vm641, %v699, 0.0
          %v714 = vadd.f32 %v712, %v713
          %v715 = vsel %vm641, %v700, 0.0
          %v716 = vadd.f32 %v714, %v715
          %v717 = vsel %vm641, %v701, 0.0
          %v718 = vadd.f32 %v716, %v717
          %v719 = vsel %vm641, %v702, 0.0
          %v720 = vadd.f32 %v718, %v719
          %v721 = vsel %vm641, %v703, 0.0
          %v722 = vadd.f32 %v720, %v721
          %v723 = vsel %vm641, %v704, 0.0
          %v724 = vadd.f32 %v722, %v723
          %v725 = vsel %vm641, %v705, 0.0
          %v726 = vadd.f32 %v724, %v725
          %v727 = vsel %vm641, %v706, 0.0
          %v728 = vadd.f32 %v726, %v727
          %v729 = vsel %vm641, %v707, 0.0
          %v730 = vadd.f32 %v728, %v729
          %v731 = vsel %vm641, %v708, 0.0
          %v732 = vadd.f32 %v730, %v731
          %v733 = vsel %vm641, %v709, 0.0
          %v734 = vadd.f32 %v732, %v733
          %735 = vadd.xlane.f32.xlu0 %v734
          %v736 = vpop.xlane.xlu0 %735
          %v737 = vrot.slane %v736, 4
          %v738 = vadd.f32 %v736, %v737
          %v739 = vrot.slane %v738, 2
          %v740 = vadd.f32 %v738, %v739
          %v741 = vrot.slane %v740, 1
          %v742 = vadd.f32 %v740, %v741
          %s743 = vtos %v742
          %v744 = vstv %s743
          %v745 = vadd.f32 %v744, 0.0
          %746 = vst [vmem:[%s206] sm:$0xff] %v745
          %v747 = vld [vmem:[#allocation3] sm:$0xff]
          %v748 = vld [vmem:[#allocation3 + $0x8] sm:$0xff]
          %v749 = vld [vmem:[#allocation3 + $0x10] sm:$0xff]
          %v750 = vld [vmem:[#allocation3 + $0x18] sm:$0xff]
          %v751 = vld [vmem:[#allocation3 + $0x20] sm:$0xff]
          %v752 = vld [vmem:[#allocation3 + $0x28] sm:$0xff]
          %v753 = vld [vmem:[#allocation3 + $0x30] sm:$0xff]
          %v754 = vld [vmem:[#allocation3 + $0x38] sm:$0xff]
          %v755 = vld [vmem:[#allocation3 + $0x40] sm:$0xff]
          %v756 = vld [vmem:[#allocation3 + $0x48] sm:$0xff]
          %v757 = vld [vmem:[#allocation3 + $0x50] sm:$0xff]
          %v758 = vld [vmem:[#allocation3 + $0x58] sm:$0xff]
          %v759 = vld [vmem:[#allocation3 + $0x60] sm:$0xff]
          %v760 = vsel %vm641, %v747, 0.0
          %v761 = vsel %vm641, %v748, 0.0
          %v762 = vadd.f32 %v760, %v761
          %v763 = vsel %vm641, %v749, 0.0
          %v764 = vadd.f32 %v762, %v763
          %v765 = vsel %vm641, %v750, 0.0
          %v766 = vadd.f32 %v764, %v765
          %v767 = vsel %vm641, %v751, 0.0
          %v768 = vadd.f32 %v766, %v767
          %v769 = vsel %vm641, %v752, 0.0
          %v770 = vadd.f32 %v768, %v769
          %v771 = vsel %vm641, %v753, 0.0
          %v772 = vadd.f32 %v770, %v771
          %v773 = vsel %vm641, %v754, 0.0
          %v774 = vadd.f32 %v772, %v773
          %v775 = vsel %vm641, %v755, 0.0
          %v776 = vadd.f32 %v774, %v775
          %v777 = vsel %vm641, %v756, 0.0
          %v778 = vadd.f32 %v776, %v777
          %v779 = vsel %vm641, %v757, 0.0
          %v780 = vadd.f32 %v778, %v779
          %v781 = vsel %vm641, %v758, 0.0
          %v782 = vadd.f32 %v780, %v781
          %v783 = vsel %vm641, %v759, 0.0
          %v784 = vadd.f32 %v782, %v783
          %785 = vadd.xlane.f32.xlu0 %v784
          %v786 = vpop.xlane.xlu0 %785
          %v787 = vrot.slane %v786, 4
          %v788 = vadd.f32 %v786, %v787
          %v789 = vrot.slane %v788, 2
          %v790 = vadd.f32 %v788, %v789
          %v791 = vrot.slane %v790, 1
          %v792 = vadd.f32 %v790, %v791
          %s793 = vtos %v792
          %v794 = vstv %s793
          %v795 = vadd.f32 %v794, 0.0
          %796 = vst [vmem:[%s213] sm:$0xff] %v795
        $region36: #{tpu_custom_call.1} parent=27 // pred_fallthru
          _
        %s797 = sand.u32 %s97, 1
        %s798 = scalar_lea.sflag [#allocation5], %s797
        %s799 = sand.u32 %s97, 1
        %s800 = smul.addr %s799, 8
        %s801 = scalar_lea.vmem [#allocation4], %s800
        %s802 = sand.u32 %s123, 1
        %s803 = scalar_lea.sflag [#allocation7], %s802
        %s804 = sand.u32 %s123, 1
        %s805 = smul.addr %s804, 8
        %s806 = scalar_lea.vmem [#allocation6], %s805
        // Predicated region
        $region37: #{tpu_custom_call.1} parent=27 // pred_check
          %p807 = pneg %p107
        $region38: #{tpu_custom_call.1} parent=27 // pred_check_branch
          %809 = sbr.rel (%p807) target = $region40
        $region39: #{tpu_custom_call.1} parent=27 // pred_region
          %s811 = ssub.s32 128, 128
          %812 = vsyncadd %s798, %s811
          %s813 = smul.addr %s25, 128
          %s814 = scalar_lea.hbm %s2, %s813
          %s816 = sshll.u32 %s801, 4
          %s817 = int_to_ptr.vmem [resolvable:$true] %s816
          %819 = dma.vmem_to_hbm [thread:$0]  %s817, 128, %s814, %s798
        $region40: #{tpu_custom_call.1} parent=27 // pred_fallthru
          _
        // Predicated region
        $region41: #{tpu_custom_call.1} parent=27 // pred_check
          %p820 = pneg %p133
        $region42: #{tpu_custom_call.1} parent=27 // pred_check_branch
          %822 = sbr.rel (%p820) target = $region44
        $region43: #{tpu_custom_call.1} parent=27 // pred_region
          %s824 = ssub.s32 128, 128
          %825 = vsyncadd %s803, %s824
          %s826 = smul.addr %s25, 128
          %s827 = scalar_lea.hbm %s3, %s826
          %s829 = sshll.u32 %s806, 4
          %s830 = int_to_ptr.vmem [resolvable:$true] %s829
          %832 = dma.vmem_to_hbm [thread:$0]  %s830, 128, %s827, %s803
        $region44: #{tpu_custom_call.1} parent=27 // pred_fallthru
          _
      $region28: #{tpu_custom_call.1} parent=5 // pred_fallthru
        _
      %p833 = scmp.le.s32.totalorder 2, %s16
      // Predicated region
      $region45: #{tpu_custom_call.1} parent=5 // pred_check
        %p834 = pneg %p833
      $region46: #{tpu_custom_call.1} parent=5 // pred_check_branch
        %836 = sbr.rel (%p834) target = $region48
      $region47: #{tpu_custom_call.1} parent=5 // pred_region
        %s837 = ssub.s32 %s16, 2
        // Predicated region
        $region49: #{tpu_custom_call.1} parent=47 // pred_check
          %p838 = pneg %p113
        $region50: #{tpu_custom_call.1} parent=47 // pred_check_branch
          %840 = sbr.rel (%p838) target = $region52
        $region51: #{tpu_custom_call.1} parent=47 // pred_region
          %s841 = sand.u32 %s98, 1
          %s842 = scalar_lea.sflag [#allocation5], %s841
          %s843 = sand.u32 %s98, 1
          %s844 = smul.addr %s843, 8
          %s845 = scalar_lea.vmem [#allocation4], %s844
          %846 = dma.done %s842, 128
        $region52: #{tpu_custom_call.1} parent=47 // pred_fallthru
          _
        // Predicated region
        $region53: #{tpu_custom_call.1} parent=47 // pred_check
          %p847 = pneg %p139
        $region54: #{tpu_custom_call.1} parent=47 // pred_check_branch
          %849 = sbr.rel (%p847) target = $region56
        $region55: #{tpu_custom_call.1} parent=47 // pred_region
          %s850 = sand.u32 %s124, 1
          %s851 = scalar_lea.sflag [#allocation7], %s850
          %s852 = sand.u32 %s124, 1
          %s853 = smul.addr %s852, 8
          %s854 = scalar_lea.vmem [#allocation6], %s853
          %855 = dma.done %s851, 128
        $region56: #{tpu_custom_call.1} parent=47 // pred_fallthru
          _
      $region48: #{tpu_custom_call.1} parent=5 // pred_fallthru
        _
    $region6: #{tpu_custom_call.1} parent=1 // loop_footer
      %s20 = sadd.s32 1, %s16
    $region7: #{tpu_custom_call.1} parent=1 // loop_footer_branch
      %15 = sbr.rel target = $region3
    $region8: #{tpu_custom_call.1} parent=1 // loop_exit
      _
    %856 = vsyncpa [#allocation5], 1
    %s857 = scalar_lea.sflag [#allocation5], 1
    %858 = vsyncpa %s857, 1
    %859 = vsyncpa [#allocation7], 1
    %s860 = scalar_lea.sflag [#allocation7], 1
    %861 = vsyncpa %s860, 1

</llo_original>
